<compile_context>
chip_gen: v7x
topology: tpu7x:2x2x1
jax: 0.10.0
libtpu: 0.0.40
codegen_flags: <defaults>
</compile_context>

<pallas_src>
import jax
import jax.numpy as jnp
from jax.experimental import pallas as pl
from jax.experimental.pallas import tpu as pltpu

# ----------------------------- config --------------------------------------
D_TIME = 32        # config.D_time
NUM_EXPERTS = 4    # K_MOTE experts
NUM_CLASSES = 10   # classifier output
C_PAD = 128        # lane-padded class dim
BATCH = 2
SEQ = 8


# ----------------------------- kernel --------------------------------------
def kan_mote_kernel(x_ref, wg_ref, bg_ref, we_ref, be_ref, wc_ref, bc_ref,
                    logits_ref, weights_ref, masks_ref):
    BS = x_ref.shape[0]                 # B * S positions (sublane axis)
    E = weights_ref.shape[1]            # experts
    ED = we_ref.shape[1]                # E * D_time == 128 (full lane width)
    D = ED // E
    B = logits_ref.shape[0]
    S = BS // B

    # timestamps = x.float() / 783.0 ; column layout [BS, 1]
    t = x_ref[...].astype(jnp.float32) / jnp.float32(783.0)

    # --- gating: element-wise softmax over E experts (scalars from SMEM) -----
    gl = [t * wg_ref[e] + bg_ref[e] for e in range(E)]          # E x [BS, 1]
    gmax = gl[0]
    for e in range(1, E):
        gmax = jnp.maximum(gmax, gl[e])
    ex = [jnp.exp(g - gmax) for g in gl]
    denom = ex[0]
    for e in range(1, E):
        denom = denom + ex[e]
    inv_denom = 1.0 / denom                                     # exact (emitted)
    w = [ex[e] * inv_denom for e in range(E)]                   # softmax gates

    # --- exact top-2 mask (element-wise, lowest index wins on ties) ----------
    m1v = ex[0]
    m1i = jnp.zeros_like(m1v, dtype=jnp.int32)
    for e in range(1, E):
        take = ex[e] > m1v
        m1v = jnp.where(take, ex[e], m1v)
        m1i = jnp.where(take, e, m1i)
    m2v = jnp.full_like(m1v, -1.0)          # exp(.) > 0, so -1 is a safe -inf
    m2i = jnp.full_like(m1i, -1)
    for e in range(E):
        cand = jnp.logical_and(m1i != e, ex[e] > m2v)
        m2v = jnp.where(cand, ex[e], m2v)
        m2i = jnp.where(cand, e, m2i)
    mk = [((m1i == e) | (m2i == e)).astype(jnp.float32) for e in range(E)]
    g = [w[e] * mk[e] for e in range(E)]                        # gated coeffs [BS,1]

    # --- lane-packed experts for all B*S positions at once -------------------
    # phi = t * W_flat + b_flat  (cos expert's bias already shifted by +pi/2)
    phi = t * we_ref[...] + be_ref[...]                         # [BS, ED]
    lane = jax.lax.broadcasted_iota(jnp.int32, (1, ED), 1)
    # lanes [0,2D): sin (experts 0 and 1 after the cos->sin fold),
    # lanes [2D,3D): tanh, lanes [3D,4D): identity; gates fused per branch.
    gated = jnp.where(
        lane < 2 * D,
        jnp.where(lane < D, g[0], g[1]) * jnp.sin(phi),
        jnp.where(lane < 3 * D, g[2] * jnp.tanh(phi), g[3] * phi))

    # sum the E D-wide lane segments: two XLU rolls + adds, then lanes [0, D)
    r = gated + pltpu.roll(gated, shift=2 * D, axis=1)
    r = r + pltpu.roll(r, shift=D, axis=1)
    combined = r[:, :D]                                         # [BS, D] embeddings

    # --- mean pool over seq + batched classifier (lane-padded classes) -------
    pooled = jnp.sum(combined.reshape(B, S, D), axis=1) * jnp.float32(1.0 / S)
    logits_ref[...] = jnp.dot(pooled, wc_ref[...],
                              preferred_element_type=jnp.float32) + bc_ref[...]

    # --- weights / masks: ONE coalesced [BS, E] store each --------------------
    elane = jax.lax.broadcasted_iota(jnp.int32, (1, E), 1)
    weights_ref[...] = jnp.where(elane == 0, w[0],
                       jnp.where(elane == 1, w[1],
                       jnp.where(elane == 2, w[2], w[3])))
    masks_ref[...] = jnp.where(elane == 0, mk[0],
                     jnp.where(elane == 1, mk[1],
                     jnp.where(elane == 2, mk[2], mk[3])))


# ----------------------------- wrapper --------------------------------------
def simple_kan_mote_forward(x, params):
    B, S = x.shape
    E, D = params["W_exp"].shape
    C = params["W_cls"].shape[1]
    BS = B * S
    assert E * D == 128, "lane-packed expert path assumes E * D_time == 128"

    # Layout plumbing (done once, outside the kernel).
    x_col = x.reshape(BS, 1)
    wg = params["W_gate"].reshape(E).astype(jnp.float32)
    bg = params["b_gate"].reshape(E).astype(jnp.float32)
    we = params["W_exp"].reshape(1, E * D).astype(jnp.float32)
    # cos -> sin fold: shift the cos expert's (expert 1) bias lanes by +pi/2
    be = (params["b_exp"].astype(jnp.float32)
          .at[1, :].add(jnp.float32(jnp.pi / 2))
          .reshape(1, E * D))
    wc = jnp.zeros((D, C_PAD), jnp.float32).at[:, :C].set(params["W_cls"])
    bc = jnp.zeros((1, C_PAD), jnp.float32).at[:, :C].set(params["b_cls"])

    in_specs = [
        pl.BlockSpec((BS, 1), lambda i: (0, 0)),                   # x (flat column)
        pl.BlockSpec(memory_space=pltpu.MemorySpace.SMEM),         # W_gate scalars
        pl.BlockSpec(memory_space=pltpu.MemorySpace.SMEM),         # b_gate scalars
        pl.BlockSpec((1, E * D), lambda i: (0, 0)),                # W_exp (packed)
        pl.BlockSpec((1, E * D), lambda i: (0, 0)),                # b_exp (packed, shifted)
        pl.BlockSpec((D, C_PAD), lambda i: (0, 0)),                # W_cls (padded)
        pl.BlockSpec((1, C_PAD), lambda i: (0, 0)),                # b_cls (padded)
    ]
    out_shape = (
        jax.ShapeDtypeStruct((B, C_PAD), jnp.float32),             # logits (padded)
        jax.ShapeDtypeStruct((BS, E), jnp.float32),                # weights [B*S, E]
        jax.ShapeDtypeStruct((BS, E), jnp.float32),                # masks   [B*S, E]
    )
    out_specs = (
        pl.BlockSpec((B, C_PAD), lambda i: (0, 0)),
        pl.BlockSpec((BS, E), lambda i: (0, 0)),
        pl.BlockSpec((BS, E), lambda i: (0, 0)),
    )

    logits_pad, weights, masks = pl.pallas_call(
        kan_mote_kernel,
        grid=(1,),                    # single step: whole problem is ~1 vreg of data
        in_specs=in_specs,
        out_specs=out_specs,
        out_shape=out_shape,
    )(x_col, wg, bg, we, be, wc, bc)

    logits = logits_pad[:, :C]
    return logits, {"weights": weights, "masks": masks}


# ----------------------------- pure-JAX reference ----------------------------
def reference_forward(x, params):
    B, S = x.shape
    E, D = params["W_exp"].shape
    t = x.astype(jnp.float32).reshape(-1, 1) / 783.0                    # [N, 1]
    gl = t * params["W_gate"] + params["b_gate"]                        # [N, E]
    ex = jnp.exp(gl - jnp.max(gl, axis=-1, keepdims=True))
    w = ex / jnp.sum(ex, axis=-1, keepdims=True)
    m1i = jnp.argmax(ex, axis=-1)
    ex_m = jnp.where(jax.nn.one_hot(m1i, E, dtype=jnp.bool_), -1.0, ex)
    m2i = jnp.argmax(ex_m, axis=-1)
    mk = (jax.nn.one_hot(m1i, E) + jax.nn.one_hot(m2i, E)).astype(jnp.float32)
    phi = t[:, :, None] * params["W_exp"][None] + params["b_exp"][None]  # [N, E, D]
    acts = jnp.stack([jnp.sin(phi[:, 0]), jnp.cos(phi[:, 1]),
                      jnp.tanh(phi[:, 2]), phi[:, 3]], axis=1)           # [N, E, D]
    emb = jnp.sum((w * mk)[:, :, None] * acts, axis=1)                   # [N, D]
    pooled = emb.reshape(B, S, D).mean(axis=1)
    logits = pooled @ params["W_cls"] + params["b_cls"]
    return logits, w, mk


def init_params(key, d_time=D_TIME, n_exp=NUM_EXPERTS, n_cls=NUM_CLASSES):
    k = jax.random.split(key, 6)
    return {
        "W_gate": 0.5 * jax.random.normal(k[0], (1, n_exp), jnp.float32),
        "b_gate": 0.1 * jax.random.normal(k[1], (1, n_exp), jnp.float32),
        "W_exp":  1.0 * jax.random.normal(k[2], (n_exp, d_time), jnp.float32),
        "b_exp":  0.1 * jax.random.normal(k[3], (n_exp, d_time), jnp.float32),
        "W_cls":  (1.0 / jnp.sqrt(d_time)) *
                  jax.random.normal(k[4], (d_time, n_cls), jnp.float32),
        "b_cls":  0.01 * jax.random.normal(k[5], (1, n_cls), jnp.float32),
    }


if __name__ == "__main__":
    key = jax.random.PRNGKey(0)
    k_x, k_p = jax.random.split(key)

    # x: [batch, seq] integer timestamps in [0, 783]
    x = jax.random.randint(k_x, (BATCH, SEQ), 0, 784, dtype=jnp.int32)
    params = init_params(k_p)

    logits, aux = simple_kan_mote_forward(x, params)
    jax.block_until_ready((logits, aux["weights"], aux["masks"]))

    assert logits.shape == (BATCH, NUM_CLASSES)
    assert aux["weights"].shape == (BATCH * SEQ, NUM_EXPERTS)
    assert aux["masks"].shape == (BATCH * SEQ, NUM_EXPERTS)
    # exactly-2 experts selected per position
    assert bool(jnp.all(jnp.sum(aux["masks"], axis=-1) == 2.0))

    # correctness vs. a pure-JAX reference of the reconstructed module
    ref_logits, ref_w, ref_mk = reference_forward(x, params)
    assert bool(jnp.allclose(logits, ref_logits, atol=2e-2, rtol=2e-2))
    assert bool(jnp.allclose(aux["weights"], ref_w, atol=1e-4, rtol=1e-4))
    assert bool(jnp.allclose(aux["masks"], ref_mk, atol=1e-6))

    print("KERNEL_OK")
</pallas_src>

<mosaic_0001>
module attributes {stable_mosaic.version = 11 : i64} {
  func.func @kan_mote_kernel(%arg0: i32, %arg1: memref<16x1xi32, #tpu.memory_space<vmem>>, %arg2: memref<4xf32, #tpu.memory_space<smem>>, %arg3: memref<4xf32, #tpu.memory_space<smem>>, %arg4: memref<1x128xf32, #tpu.memory_space<vmem>>, %arg5: memref<1x128xf32, #tpu.memory_space<vmem>>, %arg6: memref<32x128xf32, #tpu.memory_space<vmem>>, %arg7: memref<1x128xf32, #tpu.memory_space<vmem>>, %arg8: memref<2x128xf32, #tpu.memory_space<vmem>>, %arg9: memref<16x4xf32, #tpu.memory_space<vmem>>, %arg10: memref<16x4xf32, #tpu.memory_space<vmem>>) attributes {dimension_semantics = [#tpu.dimension_semantics<arbitrary>], iteration_bounds = array<i64: 1>, scalar_prefetch = 0 : i64, scratch_operands = 0 : i64, tpu.core_type = #tpu.core_type<tc>, window_params = [{pipeline_mode = #tpu.pipeline_mode<synchronous>, transform_indices = @transform_0, window_bounds = array<i64: 16, 1>}, {transform_indices = @transform_1, window_bounds = array<i64: 4>}, {transform_indices = @transform_2, window_bounds = array<i64: 4>}, {pipeline_mode = #tpu.pipeline_mode<synchronous>, transform_indices = @transform_3, window_bounds = array<i64: 1, 128>}, {pipeline_mode = #tpu.pipeline_mode<synchronous>, transform_indices = @transform_4, window_bounds = array<i64: 1, 128>}, {pipeline_mode = #tpu.pipeline_mode<synchronous>, transform_indices = @transform_5, window_bounds = array<i64: 32, 128>}, {pipeline_mode = #tpu.pipeline_mode<synchronous>, transform_indices = @transform_6, window_bounds = array<i64: 1, 128>}, {pipeline_mode = #tpu.pipeline_mode<synchronous>, transform_indices = @transform_7, window_bounds = array<i64: 2, 128>}, {pipeline_mode = #tpu.pipeline_mode<synchronous>, transform_indices = @transform_8, window_bounds = array<i64: 16, 4>}, {pipeline_mode = #tpu.pipeline_mode<synchronous>, transform_indices = @transform_9, window_bounds = array<i64: 16, 4>}]} {
    %c0 = arith.constant 0 : index
    %c0_0 = arith.constant 0 : index
    %0 = vector.load %arg1[%c0, %c0_0] : memref<16x1xi32, #tpu.memory_space<vmem>>, vector<16x1xi32>
    %1 = arith.sitofp %0 : vector<16x1xi32> to vector<16x1xf32>
    %cst = arith.constant 7.830000e+02 : f32
    %2 = vector.broadcast %cst : f32 to vector<16x1xf32>
    %3 = arith.divf %1, %2 : vector<16x1xf32>
    %c0_1 = arith.constant 0 : index
    %4 = memref.load %arg2[%c0_1] : memref<4xf32, #tpu.memory_space<smem>>
    %5 = vector.broadcast %4 : f32 to vector<16x1xf32>
    %6 = arith.mulf %3, %5 : vector<16x1xf32>
    %c0_2 = arith.constant 0 : index
    %7 = memref.load %arg3[%c0_2] : memref<4xf32, #tpu.memory_space<smem>>
    %8 = vector.broadcast %7 : f32 to vector<16x1xf32>
    %9 = arith.addf %6, %8 : vector<16x1xf32>
    %c1 = arith.constant 1 : index
    %10 = memref.load %arg2[%c1] : memref<4xf32, #tpu.memory_space<smem>>
    %11 = vector.broadcast %10 : f32 to vector<16x1xf32>
    %12 = arith.mulf %3, %11 : vector<16x1xf32>
    %c1_3 = arith.constant 1 : index
    %13 = memref.load %arg3[%c1_3] : memref<4xf32, #tpu.memory_space<smem>>
    %14 = vector.broadcast %13 : f32 to vector<16x1xf32>
    %15 = arith.addf %12, %14 : vector<16x1xf32>
    %c2 = arith.constant 2 : index
    %16 = memref.load %arg2[%c2] : memref<4xf32, #tpu.memory_space<smem>>
    %17 = vector.broadcast %16 : f32 to vector<16x1xf32>
    %18 = arith.mulf %3, %17 : vector<16x1xf32>
    %c2_4 = arith.constant 2 : index
    %19 = memref.load %arg3[%c2_4] : memref<4xf32, #tpu.memory_space<smem>>
    %20 = vector.broadcast %19 : f32 to vector<16x1xf32>
    %21 = arith.addf %18, %20 : vector<16x1xf32>
    %c3 = arith.constant 3 : index
    %22 = memref.load %arg2[%c3] : memref<4xf32, #tpu.memory_space<smem>>
    %23 = vector.broadcast %22 : f32 to vector<16x1xf32>
    %24 = arith.mulf %3, %23 : vector<16x1xf32>
    %c3_5 = arith.constant 3 : index
    %25 = memref.load %arg3[%c3_5] : memref<4xf32, #tpu.memory_space<smem>>
    %26 = vector.broadcast %25 : f32 to vector<16x1xf32>
    %27 = arith.addf %24, %26 : vector<16x1xf32>
    %28 = arith.maximumf %9, %15 : vector<16x1xf32>
    %29 = arith.maximumf %28, %21 : vector<16x1xf32>
    %30 = arith.maximumf %29, %27 : vector<16x1xf32>
    %31 = arith.subf %9, %30 : vector<16x1xf32>
    %32 = math.exp %31 : vector<16x1xf32>
    %33 = arith.subf %15, %30 : vector<16x1xf32>
    %34 = math.exp %33 : vector<16x1xf32>
    %35 = arith.subf %21, %30 : vector<16x1xf32>
    %36 = math.exp %35 : vector<16x1xf32>
    %37 = arith.subf %27, %30 : vector<16x1xf32>
    %38 = math.exp %37 : vector<16x1xf32>
    %39 = arith.addf %32, %34 : vector<16x1xf32>
    %40 = arith.addf %39, %36 : vector<16x1xf32>
    %41 = arith.addf %40, %38 : vector<16x1xf32>
    %cst_6 = arith.constant 1.000000e+00 : f32
    %42 = vector.broadcast %cst_6 : f32 to vector<16x1xf32>
    %43 = arith.divf %42, %41 : vector<16x1xf32>
    %44 = arith.mulf %32, %43 : vector<16x1xf32>
    %45 = arith.mulf %34, %43 : vector<16x1xf32>
    %46 = arith.mulf %36, %43 : vector<16x1xf32>
    %47 = arith.mulf %38, %43 : vector<16x1xf32>
    %c0_i32 = arith.constant 0 : i32
    %48 = vector.broadcast %c0_i32 : i32 to vector<16x1xi32>
    %49 = arith.cmpf ogt, %34, %32 : vector<16x1xf32>
    %50 = arith.select %49, %34, %32 : vector<16x1xi1>, vector<16x1xf32>
    %c1_i32 = arith.constant 1 : i32
    %51 = vector.broadcast %c1_i32 : i32 to vector<16x1xi32>
    %52 = arith.select %49, %51, %48 : vector<16x1xi1>, vector<16x1xi32>
    %53 = arith.cmpf ogt, %36, %50 : vector<16x1xf32>
    %54 = arith.select %53, %36, %50 : vector<16x1xi1>, vector<16x1xf32>
    %c2_i32 = arith.constant 2 : i32
    %55 = vector.broadcast %c2_i32 : i32 to vector<16x1xi32>
    %56 = arith.select %53, %55, %52 : vector<16x1xi1>, vector<16x1xi32>
    %57 = arith.cmpf ogt, %38, %54 : vector<16x1xf32>
    %c3_i32 = arith.constant 3 : i32
    %58 = vector.broadcast %c3_i32 : i32 to vector<16x1xi32>
    %59 = arith.select %57, %58, %56 : vector<16x1xi1>, vector<16x1xi32>
    %cst_7 = arith.constant -1.000000e+00 : f32
    %60 = vector.broadcast %cst_7 : f32 to vector<16x1xf32>
    %c-1_i32 = arith.constant -1 : i32
    %61 = vector.broadcast %c-1_i32 : i32 to vector<16x1xi32>
    %c0_i32_8 = arith.constant 0 : i32
    %62 = vector.broadcast %c0_i32_8 : i32 to vector<16x1xi32>
    %63 = arith.cmpi ne, %59, %62 : vector<16x1xi32>
    %64 = arith.cmpf ogt, %32, %60 : vector<16x1xf32>
    %65 = arith.andi %63, %64 : vector<16x1xi1>
    %66 = arith.select %65, %32, %60 : vector<16x1xi1>, vector<16x1xf32>
    %c0_i32_9 = arith.constant 0 : i32
    %67 = vector.broadcast %c0_i32_9 : i32 to vector<16x1xi32>
    %68 = arith.select %65, %67, %61 : vector<16x1xi1>, vector<16x1xi32>
    %c1_i32_10 = arith.constant 1 : i32
    %69 = vector.broadcast %c1_i32_10 : i32 to vector<16x1xi32>
    %70 = arith.cmpi ne, %59, %69 : vector<16x1xi32>
    %71 = arith.cmpf ogt, %34, %66 : vector<16x1xf32>
    %72 = arith.andi %70, %71 : vector<16x1xi1>
    %73 = arith.select %72, %34, %66 : vector<16x1xi1>, vector<16x1xf32>
    %c1_i32_11 = arith.constant 1 : i32
    %74 = vector.broadcast %c1_i32_11 : i32 to vector<16x1xi32>
    %75 = arith.select %72, %74, %68 : vector<16x1xi1>, vector<16x1xi32>
    %c2_i32_12 = arith.constant 2 : i32
    %76 = vector.broadcast %c2_i32_12 : i32 to vector<16x1xi32>
    %77 = arith.cmpi ne, %59, %76 : vector<16x1xi32>
    %78 = arith.cmpf ogt, %36, %73 : vector<16x1xf32>
    %79 = arith.andi %77, %78 : vector<16x1xi1>
    %80 = arith.select %79, %36, %73 : vector<16x1xi1>, vector<16x1xf32>
    %c2_i32_13 = arith.constant 2 : i32
    %81 = vector.broadcast %c2_i32_13 : i32 to vector<16x1xi32>
    %82 = arith.select %79, %81, %75 : vector<16x1xi1>, vector<16x1xi32>
    %c3_i32_14 = arith.constant 3 : i32
    %83 = vector.broadcast %c3_i32_14 : i32 to vector<16x1xi32>
    %84 = arith.cmpi ne, %59, %83 : vector<16x1xi32>
    %85 = arith.cmpf ogt, %38, %80 : vector<16x1xf32>
    %86 = arith.andi %84, %85 : vector<16x1xi1>
    %c3_i32_15 = arith.constant 3 : i32
    %87 = vector.broadcast %c3_i32_15 : i32 to vector<16x1xi32>
    %88 = arith.select %86, %87, %82 : vector<16x1xi1>, vector<16x1xi32>
    %c0_i32_16 = arith.constant 0 : i32
    %89 = vector.broadcast %c0_i32_16 : i32 to vector<16x1xi32>
    %90 = arith.cmpi eq, %59, %89 : vector<16x1xi32>
    %c0_i32_17 = arith.constant 0 : i32
    %91 = vector.broadcast %c0_i32_17 : i32 to vector<16x1xi32>
    %92 = arith.cmpi eq, %88, %91 : vector<16x1xi32>
    %93 = arith.ori %90, %92 : vector<16x1xi1>
    %94 = arith.extui %93 : vector<16x1xi1> to vector<16x1xi32>
    %95 = arith.sitofp %94 : vector<16x1xi32> to vector<16x1xf32>
    %c1_i32_18 = arith.constant 1 : i32
    %96 = vector.broadcast %c1_i32_18 : i32 to vector<16x1xi32>
    %97 = arith.cmpi eq, %59, %96 : vector<16x1xi32>
    %c1_i32_19 = arith.constant 1 : i32
    %98 = vector.broadcast %c1_i32_19 : i32 to vector<16x1xi32>
    %99 = arith.cmpi eq, %88, %98 : vector<16x1xi32>
    %100 = arith.ori %97, %99 : vector<16x1xi1>
    %101 = arith.extui %100 : vector<16x1xi1> to vector<16x1xi32>
    %102 = arith.sitofp %101 : vector<16x1xi32> to vector<16x1xf32>
    %c2_i32_20 = arith.constant 2 : i32
    %103 = vector.broadcast %c2_i32_20 : i32 to vector<16x1xi32>
    %104 = arith.cmpi eq, %59, %103 : vector<16x1xi32>
    %c2_i32_21 = arith.constant 2 : i32
    %105 = vector.broadcast %c2_i32_21 : i32 to vector<16x1xi32>
    %106 = arith.cmpi eq, %88, %105 : vector<16x1xi32>
    %107 = arith.ori %104, %106 : vector<16x1xi1>
    %108 = arith.extui %107 : vector<16x1xi1> to vector<16x1xi32>
    %109 = arith.sitofp %108 : vector<16x1xi32> to vector<16x1xf32>
    %c3_i32_22 = arith.constant 3 : i32
    %110 = vector.broadcast %c3_i32_22 : i32 to vector<16x1xi32>
    %111 = arith.cmpi eq, %59, %110 : vector<16x1xi32>
    %c3_i32_23 = arith.constant 3 : i32
    %112 = vector.broadcast %c3_i32_23 : i32 to vector<16x1xi32>
    %113 = arith.cmpi eq, %88, %112 : vector<16x1xi32>
    %114 = arith.ori %111, %113 : vector<16x1xi1>
    %115 = arith.extui %114 : vector<16x1xi1> to vector<16x1xi32>
    %116 = arith.sitofp %115 : vector<16x1xi32> to vector<16x1xf32>
    %117 = arith.mulf %44, %95 : vector<16x1xf32>
    %118 = arith.mulf %45, %102 : vector<16x1xf32>
    %119 = arith.mulf %46, %109 : vector<16x1xf32>
    %120 = arith.mulf %47, %116 : vector<16x1xf32>
    %c0_24 = arith.constant 0 : index
    %c0_25 = arith.constant 0 : index
    %121 = vector.load %arg4[%c0_24, %c0_25] : memref<1x128xf32, #tpu.memory_space<vmem>>, vector<1x128xf32>
    %122 = vector.broadcast %3 : vector<16x1xf32> to vector<16x128xf32>
    %123 = vector.broadcast %121 : vector<1x128xf32> to vector<16x128xf32>
    %124 = arith.mulf %122, %123 : vector<16x128xf32>
    %c0_26 = arith.constant 0 : index
    %c0_27 = arith.constant 0 : index
    %125 = vector.load %arg5[%c0_26, %c0_27] : memref<1x128xf32, #tpu.memory_space<vmem>>, vector<1x128xf32>
    %126 = vector.broadcast %125 : vector<1x128xf32> to vector<16x128xf32>
    %127 = arith.addf %124, %126 : vector<16x128xf32>
    %128 = tpu.iota {dimensions = array<i32: 1>} : vector<1x128xi32>
    %c64_i32 = arith.constant 64 : i32
    %129 = vector.broadcast %c64_i32 : i32 to vector<1x128xi32>
    %130 = arith.cmpi slt, %128, %129 : vector<1x128xi32>
    %c32_i32 = arith.constant 32 : i32
    %131 = vector.broadcast %c32_i32 : i32 to vector<1x128xi32>
    %132 = arith.cmpi slt, %128, %131 : vector<1x128xi32>
    %133 = vector.shape_cast %132 : vector<1x128xi1> to vector<1x128xi1>
    %134 = vector.broadcast %133 : vector<1x128xi1> to vector<16x128xi1>
    %135 = vector.shape_cast %117 : vector<16x1xf32> to vector<16x1xf32>
    %136 = vector.broadcast %135 : vector<16x1xf32> to vector<16x128xf32>
    %137 = vector.shape_cast %118 : vector<16x1xf32> to vector<16x1xf32>
    %138 = vector.broadcast %137 : vector<16x1xf32> to vector<16x128xf32>
    %139 = arith.select %134, %136, %138 : vector<16x128xi1>, vector<16x128xf32>
    %140 = math.sin %127 : vector<16x128xf32>
    %141 = arith.mulf %139, %140 : vector<16x128xf32>
    %c96_i32 = arith.constant 96 : i32
    %142 = vector.broadcast %c96_i32 : i32 to vector<1x128xi32>
    %143 = arith.cmpi slt, %128, %142 : vector<1x128xi32>
    %144 = math.tanh %127 : vector<16x128xf32>
    %145 = vector.broadcast %119 : vector<16x1xf32> to vector<16x128xf32>
    %146 = arith.mulf %145, %144 : vector<16x128xf32>
    %147 = vector.broadcast %120 : vector<16x1xf32> to vector<16x128xf32>
    %148 = arith.mulf %147, %127 : vector<16x128xf32>
    %149 = vector.shape_cast %143 : vector<1x128xi1> to vector<1x128xi1>
    %150 = vector.broadcast %149 : vector<1x128xi1> to vector<16x128xi1>
    %151 = arith.select %150, %146, %148 : vector<16x128xi1>, vector<16x128xf32>
    %152 = vector.shape_cast %130 : vector<1x128xi1> to vector<1x128xi1>
    %153 = vector.broadcast %152 : vector<1x128xi1> to vector<16x128xi1>
    %154 = arith.select %153, %141, %151 : vector<16x128xi1>, vector<16x128xf32>
    %c64_i32_28 = arith.constant 64 : i32
    %155 = tpu.dynamic_rotate %154 by %c64_i32_28 dim 1 : vector<16x128xf32>, i32 -> vector<16x128xf32>
    %156 = arith.addf %154, %155 : vector<16x128xf32>
    %c32_i32_29 = arith.constant 32 : i32
    %157 = tpu.dynamic_rotate %156 by %c32_i32_29 dim 1 : vector<16x128xf32>, i32 -> vector<16x128xf32>
    %158 = arith.addf %156, %157 : vector<16x128xf32>
    %159 = vector.extract_strided_slice %158 {offsets = [0, 0], sizes = [16, 32], strides = [1, 1]} : vector<16x128xf32> to vector<16x32xf32>
    %160 = vector.shape_cast %159 : vector<16x32xf32> to vector<2x8x32xf32>
    %cst_30 = arith.constant dense<0.000000e+00> : vector<2x32xf32>
    %161 = vector.multi_reduction <add>, %160, %cst_30 [1] : vector<2x8x32xf32> to vector<2x32xf32>
    %cst_31 = arith.constant 1.250000e-01 : f32
    %162 = vector.broadcast %cst_31 : f32 to vector<2x32xf32>
    %163 = arith.mulf %161, %162 : vector<2x32xf32>
    %c0_32 = arith.constant 0 : index
    %c0_33 = arith.constant 0 : index
    %164 = vector.load %arg6[%c0_32, %c0_33] : memref<32x128xf32, #tpu.memory_space<vmem>>, vector<32x128xf32>
    %cst_34 = arith.constant dense<0.000000e+00> : vector<2x128xf32>
    %165 = tpu.matmul %163, %164, %cst_34 {dimension_numbers = #tpu.dot_dimension_numbers<[1], [0], [0], [1], [0, 0, 1, 1], [], []>} : vector<2x32xf32>, vector<32x128xf32>, vector<2x128xf32> -> vector<2x128xf32>
    %c0_35 = arith.constant 0 : index
    %c0_36 = arith.constant 0 : index
    %166 = vector.load %arg7[%c0_35, %c0_36] : memref<1x128xf32, #tpu.memory_space<vmem>>, vector<1x128xf32>
    %167 = vector.broadcast %166 : vector<1x128xf32> to vector<2x128xf32>
    %168 = arith.addf %165, %167 : vector<2x128xf32>
    %c0_37 = arith.constant 0 : index
    %c0_38 = arith.constant 0 : index
    %169 = vector.load %arg8[%c0_37, %c0_38] : memref<2x128xf32, #tpu.memory_space<vmem>>, vector<2x128xf32>
    tpu.vector_store %arg8[%c0_37, %c0_38], %168 {strides = array<i32>} : memref<2x128xf32, #tpu.memory_space<vmem>>, vector<2x128xf32>,
    %170 = tpu.iota {dimensions = array<i32: 1>} : vector<1x4xi32>
    %c0_i32_39 = arith.constant 0 : i32
    %171 = vector.broadcast %c0_i32_39 : i32 to vector<1x4xi32>
    %172 = arith.cmpi eq, %170, %171 : vector<1x4xi32>
    %c1_i32_40 = arith.constant 1 : i32
    %173 = vector.broadcast %c1_i32_40 : i32 to vector<1x4xi32>
    %174 = arith.cmpi eq, %170, %173 : vector<1x4xi32>
    %c2_i32_41 = arith.constant 2 : i32
    %175 = vector.broadcast %c2_i32_41 : i32 to vector<1x4xi32>
    %176 = arith.cmpi eq, %170, %175 : vector<1x4xi32>
    %177 = vector.shape_cast %176 : vector<1x4xi1> to vector<1x4xi1>
    %178 = vector.broadcast %177 : vector<1x4xi1> to vector<16x4xi1>
    %179 = vector.shape_cast %46 : vector<16x1xf32> to vector<16x1xf32>
    %180 = vector.broadcast %179 : vector<16x1xf32> to vector<16x4xf32>
    %181 = vector.shape_cast %47 : vector<16x1xf32> to vector<16x1xf32>
    %182 = vector.broadcast %181 : vector<16x1xf32> to vector<16x4xf32>
    %183 = arith.select %178, %180, %182 : vector<16x4xi1>, vector<16x4xf32>
    %184 = vector.shape_cast %174 : vector<1x4xi1> to vector<1x4xi1>
    %185 = vector.broadcast %184 : vector<1x4xi1> to vector<16x4xi1>
    %186 = vector.shape_cast %45 : vector<16x1xf32> to vector<16x1xf32>
    %187 = vector.broadcast %186 : vector<16x1xf32> to vector<16x4xf32>
    %188 = arith.select %185, %187, %183 : vector<16x4xi1>, vector<16x4xf32>
    %189 = vector.shape_cast %172 : vector<1x4xi1> to vector<1x4xi1>
    %190 = vector.broadcast %189 : vector<1x4xi1> to vector<16x4xi1>
    %191 = vector.shape_cast %44 : vector<16x1xf32> to vector<16x1xf32>
    %192 = vector.broadcast %191 : vector<16x1xf32> to vector<16x4xf32>
    %193 = arith.select %190, %192, %188 : vector<16x4xi1>, vector<16x4xf32>
    %c0_42 = arith.constant 0 : index
    %c0_43 = arith.constant 0 : index
    %194 = vector.load %arg9[%c0_42, %c0_43] : memref<16x4xf32, #tpu.memory_space<vmem>>, vector<16x4xf32>
    tpu.vector_store %arg9[%c0_42, %c0_43], %193 {strides = array<i32>} : memref<16x4xf32, #tpu.memory_space<vmem>>, vector<16x4xf32>,
    %c0_i32_44 = arith.constant 0 : i32
    %195 = vector.broadcast %c0_i32_44 : i32 to vector<1x4xi32>
    %196 = arith.cmpi eq, %170, %195 : vector<1x4xi32>
    %c1_i32_45 = arith.constant 1 : i32
    %197 = vector.broadcast %c1_i32_45 : i32 to vector<1x4xi32>
    %198 = arith.cmpi eq, %170, %197 : vector<1x4xi32>
    %c2_i32_46 = arith.constant 2 : i32
    %199 = vector.broadcast %c2_i32_46 : i32 to vector<1x4xi32>
    %200 = arith.cmpi eq, %170, %199 : vector<1x4xi32>
    %201 = vector.shape_cast %200 : vector<1x4xi1> to vector<1x4xi1>
    %202 = vector.broadcast %201 : vector<1x4xi1> to vector<16x4xi1>
    %203 = vector.shape_cast %109 : vector<16x1xf32> to vector<16x1xf32>
    %204 = vector.broadcast %203 : vector<16x1xf32> to vector<16x4xf32>
    %205 = vector.shape_cast %116 : vector<16x1xf32> to vector<16x1xf32>
    %206 = vector.broadcast %205 : vector<16x1xf32> to vector<16x4xf32>
    %207 = arith.select %202, %204, %206 : vector<16x4xi1>, vector<16x4xf32>
    %208 = vector.shape_cast %198 : vector<1x4xi1> to vector<1x4xi1>
    %209 = vector.broadcast %208 : vector<1x4xi1> to vector<16x4xi1>
    %210 = vector.shape_cast %102 : vector<16x1xf32> to vector<16x1xf32>
    %211 = vector.broadcast %210 : vector<16x1xf32> to vector<16x4xf32>
    %212 = arith.select %209, %211, %207 : vector<16x4xi1>, vector<16x4xf32>
    %213 = vector.shape_cast %196 : vector<1x4xi1> to vector<1x4xi1>
    %214 = vector.broadcast %213 : vector<1x4xi1> to vector<16x4xi1>
    %215 = vector.shape_cast %95 : vector<16x1xf32> to vector<16x1xf32>
    %216 = vector.broadcast %215 : vector<16x1xf32> to vector<16x4xf32>
    %217 = arith.select %214, %216, %212 : vector<16x4xi1>, vector<16x4xf32>
    %c0_47 = arith.constant 0 : index
    %c0_48 = arith.constant 0 : index
    %218 = vector.load %arg10[%c0_47, %c0_48] : memref<16x4xf32, #tpu.memory_space<vmem>>, vector<16x4xf32>
    tpu.vector_store %arg10[%c0_47, %c0_48], %217 {strides = array<i32>} : memref<16x4xf32, #tpu.memory_space<vmem>>, vector<16x4xf32>,
    return
  }
  func.func @transform_0(%arg0: i32) -> (i32, i32) {
    %c0_i32 = arith.constant 0 : i32
    %c0_i32_0 = arith.constant 0 : i32
    %c0_i32_1 = arith.constant 0 : i32
    return %c0_i32, %c0_i32_0 : i32, i32
  }
  func.func @transform_1(%arg0: i32) -> i32 {
    %c0_i32 = arith.constant 0 : i32
    %c0_i32_0 = arith.constant 0 : i32
    return %c0_i32 : i32
  }
  func.func @transform_2(%arg0: i32) -> i32 {
    %c0_i32 = arith.constant 0 : i32
    %c0_i32_0 = arith.constant 0 : i32
    return %c0_i32 : i32
  }
  func.func @transform_3(%arg0: i32) -> (i32, i32) {
    %c0_i32 = arith.constant 0 : i32
    %c0_i32_0 = arith.constant 0 : i32
    %c0_i32_1 = arith.constant 0 : i32
    return %c0_i32, %c0_i32_0 : i32, i32
  }
  func.func @transform_4(%arg0: i32) -> (i32, i32) {
    %c0_i32 = arith.constant 0 : i32
    %c0_i32_0 = arith.constant 0 : i32
    %c0_i32_1 = arith.constant 0 : i32
    return %c0_i32, %c0_i32_0 : i32, i32
  }
  func.func @transform_5(%arg0: i32) -> (i32, i32) {
    %c0_i32 = arith.constant 0 : i32
    %c0_i32_0 = arith.constant 0 : i32
    %c0_i32_1 = arith.constant 0 : i32
    return %c0_i32, %c0_i32_0 : i32, i32
  }
  func.func @transform_6(%arg0: i32) -> (i32, i32) {
    %c0_i32 = arith.constant 0 : i32
    %c0_i32_0 = arith.constant 0 : i32
    %c0_i32_1 = arith.constant 0 : i32
    return %c0_i32, %c0_i32_0 : i32, i32
  }
  func.func @transform_7(%arg0: i32) -> (i32, i32) {
    %c0_i32 = arith.constant 0 : i32
    %c0_i32_0 = arith.constant 0 : i32
    %c0_i32_1 = arith.constant 0 : i32
    return %c0_i32, %c0_i32_0 : i32, i32
  }
  func.func @transform_8(%arg0: i32) -> (i32, i32) {
    %c0_i32 = arith.constant 0 : i32
    %c0_i32_0 = arith.constant 0 : i32
    %c0_i32_1 = arith.constant 0 : i32
    return %c0_i32, %c0_i32_0 : i32, i32
  }
  func.func @transform_9(%arg0: i32) -> (i32, i32) {
    %c0_i32 = arith.constant 0 : i32
    %c0_i32_0 = arith.constant 0 : i32
    %c0_i32_1 = arith.constant 0 : i32
    return %c0_i32, %c0_i32_0 : i32, i32
  }
}

</mosaic_0001>

<llo_original>
// kernel: tpu_custom_call.1
$region0: #{tpu_custom_call.1}
  #allocation0 [shape = 'u32[]', space=smem, size = 0x4, offset = 0x4, fixed_abs, tag = 'smem constant byte address 0x4 - core index']
  #allocation1 [shape = 'u32[144,128]{1,0:T(1,128)}', space=vmem, size = 0x12000, scoped, tag = 'internal scratch']
  %s0 = inlined_call_operand.vmem [shape: s32[16,1], index: 0, kind: input, shape index: {}]
  %s1 = inlined_call_operand.vmem [shape: f32[4], index: 1, kind: input, shape index: {}]
  %s2 = inlined_call_operand.vmem [shape: f32[4], index: 2, kind: input, shape index: {}]
  %s3 = inlined_call_operand.vmem [shape: f32[1,128], index: 3, kind: input, shape index: {}]
  %s4 = inlined_call_operand.hbm [shape: f32[1,128], index: 4, kind: input, shape index: {}]
  %s5 = inlined_call_operand.vmem [shape: f32[32,128], index: 5, kind: input, shape index: {}]
  %s6 = inlined_call_operand.vmem [shape: f32[1,128], index: 6, kind: input, shape index: {}]
  %s7 = inlined_call_operand.hbm [shape: f32[2,128], index: 7, kind: output, shape index: {0}]
  %s8 = inlined_call_operand.vmem [shape: f32[16,4], index: 8, kind: output, shape index: {1}]
  %s9 = inlined_call_operand.vmem [shape: f32[16,4], index: 9, kind: output, shape index: {2}]
  %10 = xla_tuple %s7, %s8, %s9
  %s11 = sld [smem:[#allocation0]]
  $region66: #{tpu_custom_call.1} parent=0
    _
  %s13 = ssub.s32 1, %s11
  %s14 = scalar_select 0, %s13, %s11
  $region1: #{tpu_custom_call.1} parent=0
    #allocation2 [shape = 'u8[512]{0}', space=smem, size = 0x200, scoped, tag = 'input window, operand 1, single buffered']
    #allocation3 [shape = 's32[1]{0}', space=sflag, size = 0x4, scoped, tag = 'scoped memory for tpu_custom_call.1']
    #allocation4 [shape = 's32[1]{0}', space=sflag, size = 0x4, scoped, tag = 'scoped memory for tpu_custom_call.1']
    #allocation5 [shape = 's32[1]{0}', space=sflag, size = 0x4, scoped, tag = 'scoped memory for tpu_custom_call.1']
    #allocation6 [shape = 'u8[512]{0}', space=smem, size = 0x200, scoped, tag = 'input window, operand 2, single buffered']
    #allocation7 [shape = 's32[1]{0}', space=sflag, size = 0x4, scoped, tag = 'scoped memory for tpu_custom_call.1']
    #allocation8 [shape = 'u8[512]{0}', space=vmem, size = 0x400, scoped, tag = 'input window, operand 4, single buffered']
    #allocation9 [shape = 'u8[1024]{0}', space=vmem, size = 0x400, scoped, tag = 'output window, operand 0, single buffered']
    %15 = vsyncpa [#allocation5], 0
    %16 = vsyncpa [#allocation7], 0
    %17 = vsyncpa [#allocation3], 0
    %18 = vsyncpa [#allocation4], 0
    // Predicated region
    $region2: #{tpu_custom_call.1} parent=1 // pred_check
      _
    $region3: #{tpu_custom_call.1} parent=1 // pred_check_branch
      %20 = sbr.rel (0) target = $region5
    $region4: #{tpu_custom_call.1} parent=1 // pred_region
      _
    $region5: #{tpu_custom_call.1} parent=1 // pred_fallthru
      _
    // Predicated region
    $region6: #{tpu_custom_call.1} parent=1 // pred_check
      _
    $region7: #{tpu_custom_call.1} parent=1 // pred_check_branch
      %22 = sbr.rel (0) target = $region9
    $region8: #{tpu_custom_call.1} parent=1 // pred_region
      %s24 = ssub.s32 16, 16
      %25 = vsyncadd [#allocation5], %s24
      %s27 = sshll.u32 %s1, 4
      %s28 = int_to_ptr.vmem [resolvable:$true] %s27
      %30 = dma.vmem_to_smem %s28, 16, [#allocation2], [#allocation5]
    $region9: #{tpu_custom_call.1} parent=1 // pred_fallthru
      _
    // Predicated region
    $region10: #{tpu_custom_call.1} parent=1 // pred_check
      _
    $region11: #{tpu_custom_call.1} parent=1 // pred_check_branch
      %32 = sbr.rel (0) target = $region13
    $region12: #{tpu_custom_call.1} parent=1 // pred_region
      %s34 = ssub.s32 16, 16
      %35 = vsyncadd [#allocation7], %s34
      %s37 = sshll.u32 %s2, 4
      %s38 = int_to_ptr.vmem [resolvable:$true] %s37
      %40 = dma.vmem_to_smem %s38, 16, [#allocation6], [#allocation7]
    $region13: #{tpu_custom_call.1} parent=1 // pred_fallthru
      _
    // Predicated region
    $region14: #{tpu_custom_call.1} parent=1 // pred_check
      _
    $region15: #{tpu_custom_call.1} parent=1 // pred_check_branch
      %42 = sbr.rel (0) target = $region17
    $region16: #{tpu_custom_call.1} parent=1 // pred_region
      _
    $region17: #{tpu_custom_call.1} parent=1 // pred_fallthru
      _
    // Predicated region
    $region18: #{tpu_custom_call.1} parent=1 // pred_check
      _
    $region19: #{tpu_custom_call.1} parent=1 // pred_check_branch
      %44 = sbr.rel (0) target = $region21
    $region20: #{tpu_custom_call.1} parent=1 // pred_region
      %s46 = ssub.s32 16, 16
      %47 = vsyncadd [#allocation3], %s46
      %s49 = sshll.u32 [#allocation8], 4
      %s50 = int_to_ptr.vmem [resolvable:$true] %s49
      %52 = dma.hbm_to_vmem [thread:$0]  %s4, 16, %s50, [#allocation3]
    $region21: #{tpu_custom_call.1} parent=1 // pred_fallthru
      _
    // Predicated region
    $region22: #{tpu_custom_call.1} parent=1 // pred_check
      _
    $region23: #{tpu_custom_call.1} parent=1 // pred_check_branch
      %54 = sbr.rel (0) target = $region25
    $region24: #{tpu_custom_call.1} parent=1 // pred_region
      _
    $region25: #{tpu_custom_call.1} parent=1 // pred_fallthru
      _
    // Predicated region
    $region26: #{tpu_custom_call.1} parent=1 // pred_check
      _
    $region27: #{tpu_custom_call.1} parent=1 // pred_check_branch
      %56 = sbr.rel (0) target = $region29
    $region28: #{tpu_custom_call.1} parent=1 // pred_region
      _
    $region29: #{tpu_custom_call.1} parent=1 // pred_fallthru
      _
    // Predicated region
    $region30: #{tpu_custom_call.1} parent=1 // pred_check
      _
    $region31: #{tpu_custom_call.1} parent=1 // pred_check_branch
      %58 = sbr.rel (0) target = $region33
    $region32: #{tpu_custom_call.1} parent=1 // pred_region
      %59 = dma.done [#allocation5], 16
    $region33: #{tpu_custom_call.1} parent=1 // pred_fallthru
      _
    // Predicated region
    $region34: #{tpu_custom_call.1} parent=1 // pred_check
      _
    $region35: #{tpu_custom_call.1} parent=1 // pred_check_branch
      %61 = sbr.rel (0) target = $region37
    $region36: #{tpu_custom_call.1} parent=1 // pred_region
      %62 = dma.done [#allocation7], 16
    $region37: #{tpu_custom_call.1} parent=1 // pred_fallthru
      _
    // Predicated region
    $region38: #{tpu_custom_call.1} parent=1 // pred_check
      _
    $region39: #{tpu_custom_call.1} parent=1 // pred_check_branch
      %64 = sbr.rel (0) target = $region41
    $region40: #{tpu_custom_call.1} parent=1 // pred_region
      %65 = dma.done [#allocation3], 16
    $region41: #{tpu_custom_call.1} parent=1 // pred_fallthru
      _
    %66 = sfence
    %v67 = vld [vmem:[%s0] sm:$0xff]
    %v68 = vld [vmem:[%s0 + $0x8] sm:$0xff]
    %v69 = vcvt.s32.f32 %v67
    %v70 = vcvt.s32.f32 %v68
    %v71 = vrcp.pop 783.0
    %v72 = vmul.f32 %v69, %v71
    %v73 = vmul.f32 %v70, %v71
    %s74 = sld [smem:[#allocation2]]
    %v75 = vstv %s74
    %v76 = vmul.f32 %v72, %v75
    %v77 = vmul.f32 %v73, %v75
    %s78 = sld [smem:[#allocation6]]
    %v79 = vstv %s78
    %v80 = vadd.f32 %v76, %v79
    %v81 = vadd.f32 %v77, %v79
    %s82 = sld [smem:[#allocation2 + $0x1]]
    %v83 = vstv %s82
    %v84 = vmul.f32 %v72, %v83
    %v85 = vmul.f32 %v73, %v83
    %s86 = sld [smem:[#allocation6 + $0x1]]
    %v87 = vstv %s86
    %v88 = vadd.f32 %v84, %v87
    %v89 = vadd.f32 %v85, %v87
    %s90 = sld [smem:[#allocation2 + $0x2]]
    %v91 = vstv %s90
    %v92 = vmul.f32 %v72, %v91
    %v93 = vmul.f32 %v73, %v91
    %s94 = sld [smem:[#allocation6 + $0x2]]
    %v95 = vstv %s94
    %v96 = vadd.f32 %v92, %v95
    %v97 = vadd.f32 %v93, %v95
    %s98 = sld [smem:[#allocation2 + $0x3]]
    %v99 = vstv %s98
    %v100 = vmul.f32 %v72, %v99
    %v101 = vmul.f32 %v73, %v99
    %s102 = sld [smem:[#allocation6 + $0x3]]
    %v103 = vstv %s102
    %v104 = vadd.f32 %v100, %v103
    %v105 = vadd.f32 %v101, %v103
    %v106 = vmax.f32 %v80, %v88
    %v107 = vmax.f32 %v81, %v89
    %v108 = vmax.f32 %v106, %v96
    %v109 = vmax.f32 %v107, %v97
    %v110 = vmax.f32 %v108, %v104
    %v111 = vmax.f32 %v109, %v105
    %v112 = vsub.f32 %v80, %v110
    %v113 = vsub.f32 %v81, %v111
    %v114 = vmul.f32 %v112, 1.442695
    %v115 = vpow.pop %v114
    %v116 = vmul.f32 %v113, 1.442695
    %v117 = vpow.pop %v116
    %v118 = vsub.f32 %v88, %v110
    %v119 = vsub.f32 %v89, %v111
    %v120 = vmul.f32 %v118, 1.442695
    %v121 = vpow.pop %v120
    %v122 = vmul.f32 %v119, 1.442695
    %v123 = vpow.pop %v122
    %v124 = vsub.f32 %v96, %v110
    %v125 = vsub.f32 %v97, %v111
    %v126 = vmul.f32 %v124, 1.442695
    %v127 = vpow.pop %v126
    %v128 = vmul.f32 %v125, 1.442695
    %v129 = vpow.pop %v128
    %v130 = vsub.f32 %v104, %v110
    %v131 = vsub.f32 %v105, %v111
    %v132 = vmul.f32 %v130, 1.442695
    %v133 = vpow.pop %v132
    %v134 = vmul.f32 %v131, 1.442695
    %v135 = vpow.pop %v134
    %v136 = vadd.f32 %v115, %v121
    %v137 = vadd.f32 %v117, %v123
    %v138 = vadd.f32 %v136, %v127
    %v139 = vadd.f32 %v137, %v129
    %v140 = vadd.f32 %v138, %v133
    %v141 = vadd.f32 %v139, %v135
    %v142 = vrcp.pop %v140
    %v143 = vmul.f32 1.0, %v142
    %v144 = vrcp.pop %v141
    %v145 = vmul.f32 1.0, %v144
    %v146 = vmul.f32 %v115, %v143
    %v147 = vmul.f32 %v117, %v145
    %v148 = vmul.f32 %v121, %v143
    %v149 = vmul.f32 %v123, %v145
    %v150 = vmul.f32 %v127, %v143
    %v151 = vmul.f32 %v129, %v145
    %v152 = vmul.f32 %v133, %v143
    %v153 = vmul.f32 %v135, %v145
    %vm154 = vcmp.gt.f32.partialorder %v121, %v115
    %vm155 = vcmp.gt.f32.partialorder %v123, %v117
    %v156 = vsel %vm154, %v121, %v115
    %v157 = vsel %vm155, %v123, %v117
    %v158 = vsel %vm154, 1, 0
    %v159 = vsel %vm155, 1, 0
    %vm160 = vcmp.gt.f32.partialorder %v127, %v156
    %vm161 = vcmp.gt.f32.partialorder %v129, %v157
    %v162 = vsel %vm160, %v127, %v156
    %v163 = vsel %vm161, %v129, %v157
    %v164 = vsel %vm160, 2, %v158
    %v165 = vsel %vm161, 2, %v159
    %vm166 = vcmp.gt.f32.partialorder %v133, %v162
    %vm167 = vcmp.gt.f32.partialorder %v135, %v163
    %v168 = vsel %vm166, 3, %v164
    %v169 = vsel %vm167, 3, %v165
    %vm170 = vcmp.ne.s32.totalorder %v168, 0
    %vm171 = vcmp.ne.s32.totalorder %v169, 0
    %vm172 = vcmp.gt.f32.partialorder %v115, -1.0
    %vm173 = vcmp.gt.f32.partialorder %v117, -1.0
    %vm174 = vmand %vm170, %vm172
    %vm175 = vmand %vm171, %vm173
    %v176 = vsel %vm174, %v115, -1.0
    %v177 = vsel %vm175, %v117, -1.0
    %v178 = vsel %vm174, 0, 4294967295
    %v179 = vsel %vm175, 0, 4294967295
    %vm180 = vcmp.ne.s32.totalorder %v168, 1
    %vm181 = vcmp.ne.s32.totalorder %v169, 1
    %vm182 = vcmp.gt.f32.partialorder %v121, %v176
    %vm183 = vcmp.gt.f32.partialorder %v123, %v177
    %vm184 = vmand %vm180, %vm182
    %vm185 = vmand %vm181, %vm183
    %v186 = vsel %vm184, %v121, %v176
    %v187 = vsel %vm185, %v123, %v177
    %v188 = vsel %vm184, 1, %v178
    %v189 = vsel %vm185, 1, %v179
    %vm190 = vcmp.ne.s32.totalorder %v168, 2
    %vm191 = vcmp.ne.s32.totalorder %v169, 2
    %vm192 = vcmp.gt.f32.partialorder %v127, %v186
    %vm193 = vcmp.gt.f32.partialorder %v129, %v187
    %vm194 = vmand %vm190, %vm192
    %vm195 = vmand %vm191, %vm193
    %v196 = vsel %vm194, %v127, %v186
    %v197 = vsel %vm195, %v129, %v187
    %v198 = vsel %vm194, 2, %v188
    %v199 = vsel %vm195, 2, %v189
    %vm200 = vcmp.ne.s32.totalorder %v168, 3
    %vm201 = vcmp.ne.s32.totalorder %v169, 3
    %vm202 = vcmp.gt.f32.partialorder %v133, %v196
    %vm203 = vcmp.gt.f32.partialorder %v135, %v197
    %vm204 = vmand %vm200, %vm202
    %vm205 = vmand %vm201, %vm203
    %v206 = vsel %vm204, 3, %v198
    %v207 = vsel %vm205, 3, %v199
    %vm208 = vcmp.eq.s32.totalorder %v168, 0
    %vm209 = vcmp.eq.s32.totalorder %v169, 0
    %vm210 = vcmp.eq.s32.totalorder %v206, 0
    %vm211 = vcmp.eq.s32.totalorder %v207, 0
    %vm212 = vmor %vm208, %vm210
    %vm213 = vmor %vm209, %vm211
    %v214 = vsel %vm212, 1, 0
    %v215 = vsel %vm213, 1, 0
    %v216 = vcvt.s32.f32 %v214
    %v217 = vcvt.s32.f32 %v215
    %vm218 = vcmp.eq.s32.totalorder %v168, 1
    %vm219 = vcmp.eq.s32.totalorder %v169, 1
    %vm220 = vcmp.eq.s32.totalorder %v206, 1
    %vm221 = vcmp.eq.s32.totalorder %v207, 1
    %vm222 = vmor %vm218, %vm220
    %vm223 = vmor %vm219, %vm221
    %v224 = vsel %vm222, 1, 0
    %v225 = vsel %vm223, 1, 0
    %v226 = vcvt.s32.f32 %v224
    %v227 = vcvt.s32.f32 %v225
    %vm228 = vcmp.eq.s32.totalorder %v168, 2
    %vm229 = vcmp.eq.s32.totalorder %v169, 2
    %vm230 = vcmp.eq.s32.totalorder %v206, 2
    %vm231 = vcmp.eq.s32.totalorder %v207, 2
    %vm232 = vmor %vm228, %vm230
    %vm233 = vmor %vm229, %vm231
    %v234 = vsel %vm232, 1, 0
    %v235 = vsel %vm233, 1, 0
    %v236 = vcvt.s32.f32 %v234
    %v237 = vcvt.s32.f32 %v235
    %vm238 = vcmp.eq.s32.totalorder %v168, 3
    %vm239 = vcmp.eq.s32.totalorder %v169, 3
    %vm240 = vcmp.eq.s32.totalorder %v206, 3
    %vm241 = vcmp.eq.s32.totalorder %v207, 3
    %vm242 = vmor %vm238, %vm240
    %vm243 = vmor %vm239, %vm241
    %v244 = vsel %vm242, 1, 0
    %v245 = vsel %vm243, 1, 0
    %v246 = vcvt.s32.f32 %v244
    %v247 = vcvt.s32.f32 %v245
    %v248 = vmul.f32 %v146, %v216
    %v249 = vmul.f32 %v147, %v217
    %v250 = vmul.f32 %v148, %v226
    %v251 = vmul.f32 %v149, %v227
    %v252 = vmul.f32 %v150, %v236
    %v253 = vmul.f32 %v151, %v237
    %v254 = vmul.f32 %v152, %v246
    %v255 = vmul.f32 %v153, %v247
    %v256 = vld [vmem:[%s3] sm:$0x1]
    %258 = vset.pattern.permute.xlu0 0
    %259 = vperm.xlu0 %258, %v72
    %v260 = vpop.permute.xlu0 %259
    %263 = vset.pattern.permute.xlu0 0
    %264 = vperm.xlu0 %263, %v73
    %v265 = vpop.permute.xlu0 %264
    %v268 = vlaneseq
    %v269 = vshrl.u32 %v268, 7
    %v270 = vsub.s32 0, %v269
    %v271 = vrot.slane %v256, %v270
    %v273 = vmul.f32 %v260, %v271
    %v274 = vmul.f32 %v265, %v271
    %v275 = vld [vmem:[#allocation8] sm:$0x1]
    %v277 = vlaneseq
    %v278 = vshrl.u32 %v277, 7
    %v279 = vsub.s32 0, %v278
    %v280 = vrot.slane %v275, %v279
    %v282 = vadd.f32 %v273, %v280
    %v283 = vadd.f32 %v274, %v280
    %v284 = vlaneseq
    %v285 = vand.u32 %v284, 127
    %vm286 = vcmp.lt.s32.totalorder %v285, 64
    %vm287 = vcmp.lt.s32.totalorder %v285, 32
    %v288 = vsel %vm287, 1, 0
    %vm289 = vcmp.eq.s32.totalorder %v288, 1
    %291 = vset.pattern.permute.xlu0 0
    %292 = vperm.xlu0 %291, %v248
    %v293 = vpop.permute.xlu0 %292
    %296 = vset.pattern.permute.xlu0 0
    %297 = vperm.xlu0 %296, %v249
    %v298 = vpop.permute.xlu0 %297
    %301 = vset.pattern.permute.xlu0 0
    %302 = vperm.xlu0 %301, %v250
    %v303 = vpop.permute.xlu0 %302
    %306 = vset.pattern.permute.xlu0 0
    %307 = vperm.xlu0 %306, %v251
    %v308 = vpop.permute.xlu0 %307
    %v310 = vsel %vm289, %v293, %v303
    %v311 = vsel %vm289, %v298, %v308
    %v312 = vand.u32 2147483647, %v282
    %vm313 = vcmp.le.f32.partialorder %v312, 0.7853982
    %vm314 = vcmp.lt.s32.totalorder %v282, 0
    %v315 = vand.u32 %v282, 2139095040
    %v316 = vshrl.u32 %v315, 23
    %v317 = vsub.s32 %v316, 127
    %v318 = vand.u32 2147483647, %v282
    %v319 = vand.u32 %v318, 8388607
    %v320 = vor.u32 %v319, 8388608
    %v321 = vsub.s32 0, %v320
    %v322 = vadd.s32 %v317, 1
    %vm323 = vcmp.gt.s32.totalorder %v322, 0
    %v324 = vsel %vm323, %v322, 0
    %v325 = vshrl.u32 %v324, 5
    %v326 = vand.u32 %v324, 31
    %v327 = vsub.s32 32, %v326
    %v328 = vshrl.u32 683565275, %v327
    %v329 = vshll.u32 683565275, %v326
    %v330 = vshrl.u32 2475754826, %v327
    %v331 = vor.u32 %v329, %v330
    %v332 = vshll.u32 2475754826, %v326
    %v333 = vshrl.u32 2131351028, %v327
    %v334 = vor.u32 %v332, %v333
    %v335 = vshll.u32 2131351028, %v326
    %v336 = vshrl.u32 2102212464, %v327
    %v337 = vor.u32 %v335, %v336
    %v338 = vshll.u32 2102212464, %v326
    %v339 = vshrl.u32 920167782, %v327
    %v340 = vor.u32 %v338, %v339
    %v341 = vshll.u32 920167782, %v326
    %v342 = vshrl.u32 1326507024, %v327
    %v343 = vor.u32 %v341, %v342
    %vm344 = vcmp.lt.s32.totalorder %v325, 1
    %vm345 = vcmp.lt.s32.totalorder %v325, 2
    %vm346 = vcmp.lt.s32.totalorder %v325, 3
    %vm347 = vcmp.lt.s32.totalorder %v325, 4
    %v348 = vsel %vm344, %v328, %v331
    %v349 = vsel %vm347, %v337, 2102212464
    %v350 = vsel %vm346, %v334, %v349
    %v351 = vsel %vm345, %v348, %v350
    %v352 = vsel %vm344, %v331, %v334
    %v353 = vsel %vm347, %v340, 920167782
    %v354 = vsel %vm346, %v337, %v353
    %v355 = vsel %vm345, %v352, %v354
    %v356 = vsel %vm344, %v334, %v337
    %v357 = vsel %vm347, %v343, 1326507024
    %v358 = vsel %vm346, %v340, %v357
    %v359 = vsel %vm345, %v356, %v358
    %v360 = vshll.u32 %v320, 8
    %v361 = vmul.u32.u64.compose %v360, %v359
    %v362 = vextract.low.u32 %v361
    %v363 = vextract.high.u32 %v361
    %v364 = vmul.u32.u64.compose %v360, %v355
    %v365 = vextract.low.u32 %v364
    %v366 = vextract.high.u32 %v364
    %v367 = vmul.u32 %v360, %v351
    %v368 = vadd.s32 %v363, %v365
    %vm369 = vc.u32 %v363, %v365
    %v370 = vadd.s32 %v366, 1
    %v371 = vsel %vm369, %v370, %v366
    %v372 = vadd.s32 %v367, %v371
    %v373 = vadd.s32 %v372, 536870912
    %v374 = vshrl.u32 %v373, 30
    %v375 = vshll.u32 %v374, 30
    %v376 = vsub.s32 %v372, %v375
    %vm377 = vcmp.lt.s32.totalorder %v376, 0
    %v378 = vsub.s32 0, %v376
    %v379 = vsel %vm377, %v378, %v376
    %v380 = vclz %v379
    %v381 = vsub.s32 %v380, 2
    %vm382 = vcmp.gt.s32.totalorder 0, %v381
    %v383 = vsel %vm382, 0, %v381
    %v384 = vsub.s32 32, %v383
    %v385 = vshll.u32 %v376, %v383
    %v386 = vshrl.u32 %v368, %v384
    %v387 = vor.u32 %v385, %v386
    %v388 = vsub.s32 4294967266, %v383
    %v389 = vadd.s32 %v388, 127
    %v390 = vshll.u32 %v389, 23
    %v391 = vor.u32 4788187, %v390
    %v392 = vand.u32 2147483647, %v391
    %v394 = vcvt.s32.f32 %v387
    %v395 = vmul.f32 %v394, %v392
    %v396 = vxor.u32 %v395, 2147483648
    %v397 = vsel %vm314, %v396, %v395
    %v398 = vsub.s32 4, %v374
    %v399 = vsel %vm314, %v398, %v374
    %v400 = vsel %vm313, %v282, %v397
    %v401 = vsel %vm313, 0, %v399
    %v402 = vcosq.f32.pop %v400
    %v403 = vsinq.f32.pop %v400
    %vm404 = vweird.f32 %v282
    %v405 = vadd.s32 %v401, 3
    %v406 = vand.u32 %v405, 3
    %vm407 = vcmp.lt.s32.totalorder %v406, 2
    %vm408 = vcmp.eq.s32.totalorder %v406, 0
    %v409 = vxor.u32 %v403, 2147483648
    %v410 = vsel %vm408, %v402, %v409
    %vm411 = vcmp.eq.s32.totalorder %v406, 2
    %v412 = vxor.u32 %v402, 2147483648
    %v413 = vsel %vm411, %v412, %v403
    %v414 = vsel %vm407, %v410, %v413
    %v415 = vsel %vm404, nan, %v414
    %v416 = vand.u32 2147483647, %v283
    %vm417 = vcmp.le.f32.partialorder %v416, 0.7853982
    %vm418 = vcmp.lt.s32.totalorder %v283, 0
    %v419 = vand.u32 %v283, 2139095040
    %v420 = vshrl.u32 %v419, 23
    %v421 = vsub.s32 %v420, 127
    %v422 = vand.u32 2147483647, %v283
    %v423 = vand.u32 %v422, 8388607
    %v424 = vor.u32 %v423, 8388608
    %v425 = vsub.s32 0, %v424
    %v426 = vadd.s32 %v421, 1
    %vm427 = vcmp.gt.s32.totalorder %v426, 0
    %v428 = vsel %vm427, %v426, 0
    %v429 = vshrl.u32 %v428, 5
    %v430 = vand.u32 %v428, 31
    %v431 = vsub.s32 32, %v430
    %v432 = vshrl.u32 683565275, %v431
    %v433 = vshll.u32 683565275, %v430
    %v434 = vshrl.u32 2475754826, %v431
    %v435 = vor.u32 %v433, %v434
    %v436 = vshll.u32 2475754826, %v430
    %v437 = vshrl.u32 2131351028, %v431
    %v438 = vor.u32 %v436, %v437
    %v439 = vshll.u32 2131351028, %v430
    %v440 = vshrl.u32 2102212464, %v431
    %v441 = vor.u32 %v439, %v440
    %v442 = vshll.u32 2102212464, %v430
    %v443 = vshrl.u32 920167782, %v431
    %v444 = vor.u32 %v442, %v443
    %v445 = vshll.u32 920167782, %v430
    %v446 = vshrl.u32 1326507024, %v431
    %v447 = vor.u32 %v445, %v446
    %vm448 = vcmp.lt.s32.totalorder %v429, 1
    %vm449 = vcmp.lt.s32.totalorder %v429, 2
    %vm450 = vcmp.lt.s32.totalorder %v429, 3
    %vm451 = vcmp.lt.s32.totalorder %v429, 4
    %v452 = vsel %vm448, %v432, %v435
    %v453 = vsel %vm451, %v441, 2102212464
    %v454 = vsel %vm450, %v438, %v453
    %v455 = vsel %vm449, %v452, %v454
    %v456 = vsel %vm448, %v435, %v438
    %v457 = vsel %vm451, %v444, 920167782
    %v458 = vsel %vm450, %v441, %v457
    %v459 = vsel %vm449, %v456, %v458
    %v460 = vsel %vm448, %v438, %v441
    %v461 = vsel %vm451, %v447, 1326507024
    %v462 = vsel %vm450, %v444, %v461
    %v463 = vsel %vm449, %v460, %v462
    %v464 = vshll.u32 %v424, 8
    %v465 = vmul.u32.u64.compose %v464, %v463
    %v466 = vextract.low.u32 %v465
    %v467 = vextract.high.u32 %v465
    %v468 = vmul.u32.u64.compose %v464, %v459
    %v469 = vextract.low.u32 %v468
    %v470 = vextract.high.u32 %v468
    %v471 = vmul.u32 %v464, %v455
    %v472 = vadd.s32 %v467, %v469
    %vm473 = vc.u32 %v467, %v469
    %v474 = vadd.s32 %v470, 1
    %v475 = vsel %vm473, %v474, %v470
    %v476 = vadd.s32 %v471, %v475
    %v477 = vadd.s32 %v476, 536870912
    %v478 = vshrl.u32 %v477, 30
    %v479 = vshll.u32 %v478, 30
    %v480 = vsub.s32 %v476, %v479
    %vm481 = vcmp.lt.s32.totalorder %v480, 0
    %v482 = vsub.s32 0, %v480
    %v483 = vsel %vm481, %v482, %v480
    %v484 = vclz %v483
    %v485 = vsub.s32 %v484, 2
    %vm486 = vcmp.gt.s32.totalorder 0, %v485
    %v487 = vsel %vm486, 0, %v485
    %v488 = vsub.s32 32, %v487
    %v489 = vshll.u32 %v480, %v487
    %v490 = vshrl.u32 %v472, %v488
    %v491 = vor.u32 %v489, %v490
    %v492 = vsub.s32 4294967266, %v487
    %v493 = vadd.s32 %v492, 127
    %v494 = vshll.u32 %v493, 23
    %v495 = vor.u32 4788187, %v494
    %v496 = vand.u32 2147483647, %v495
    %v498 = vcvt.s32.f32 %v491
    %v499 = vmul.f32 %v498, %v496
    %v500 = vxor.u32 %v499, 2147483648
    %v501 = vsel %vm418, %v500, %v499
    %v502 = vsub.s32 4, %v478
    %v503 = vsel %vm418, %v502, %v478
    %v504 = vsel %vm417, %v283, %v501
    %v505 = vsel %vm417, 0, %v503
    %v506 = vcosq.f32.pop %v504
    %v507 = vsinq.f32.pop %v504
    %vm508 = vweird.f32 %v283
    %v509 = vadd.s32 %v505, 3
    %v510 = vand.u32 %v509, 3
    %vm511 = vcmp.lt.s32.totalorder %v510, 2
    %vm512 = vcmp.eq.s32.totalorder %v510, 0
    %v513 = vxor.u32 %v507, 2147483648
    %v514 = vsel %vm512, %v506, %v513
    %vm515 = vcmp.eq.s32.totalorder %v510, 2
    %v516 = vxor.u32 %v506, 2147483648
    %v517 = vsel %vm515, %v516, %v507
    %v518 = vsel %vm511, %v514, %v517
    %v519 = vsel %vm508, nan, %v518
    %v520 = vmul.f32 %v310, %v415
    %v521 = vmul.f32 %v311, %v519
    %vm522 = vcmp.lt.s32.totalorder %v285, 96
    %v523 = vtanh.pop %v282
    %v524 = vtanh.pop %v283
    %526 = vset.pattern.permute.xlu0 0
    %527 = vperm.xlu0 %526, %v252
    %v528 = vpop.permute.xlu0 %527
    %531 = vset.pattern.permute.xlu0 0
    %532 = vperm.xlu0 %531, %v253
    %v533 = vpop.permute.xlu0 %532
    %v535 = vmul.f32 %v528, %v523
    %v536 = vmul.f32 %v533, %v524
    %538 = vset.pattern.permute.xlu0 0
    %539 = vperm.xlu0 %538, %v254
    %v540 = vpop.permute.xlu0 %539
    %543 = vset.pattern.permute.xlu0 0
    %544 = vperm.xlu0 %543, %v255
    %v545 = vpop.permute.xlu0 %544
    %v547 = vmul.f32 %v540, %v282
    %v548 = vmul.f32 %v545, %v283
    %v549 = vsel %vm522, 1, 0
    %vm550 = vcmp.eq.s32.totalorder %v549, 1
    %v551 = vsel %vm550, %v535, %v547
    %v552 = vsel %vm550, %v536, %v548
    %v553 = vsel %vm286, 1, 0
    %vm554 = vcmp.eq.s32.totalorder %v553, 1
    %v555 = vsel %vm554, %v520, %v551
    %v556 = vsel %vm554, %v521, %v552
    %557 = vrot.lane.b32.xlu0 %v555, 64
    %v558 = vpop.permute.xlu0 %557
    %559 = vrot.lane.b32.xlu0 %v556, 64
    %v560 = vpop.permute.xlu0 %559
    %v561 = vadd.f32 %v555, %v558
    %v562 = vadd.f32 %v556, %v560
    %563 = vrot.lane.b32.xlu0 %v561, 32
    %v564 = vpop.permute.xlu0 %563
    %565 = vrot.lane.b32.xlu0 %v562, 32
    %v566 = vpop.permute.xlu0 %565
    %v567 = vadd.f32 %v561, %v564
    %v568 = vadd.f32 %v562, %v566
    %vm569 = vcmask 261120
    %v570 = vsel %vm569, %v567, 0.0
    %v571 = vrot.slane %v570, 4
    %v572 = vadd.f32 %v570, %v571
    %v573 = vrot.slane %v572, 2
    %v574 = vadd.f32 %v572, %v573
    %v575 = vrot.slane %v574, 1
    %v576 = vadd.f32 %v574, %v575
    %v577 = vsel %vm569, %v568, 0.0
    %v578 = vrot.slane %v577, 4
    %v579 = vadd.f32 %v577, %v578
    %v580 = vrot.slane %v579, 2
    %v581 = vadd.f32 %v579, %v580
    %v582 = vrot.slane %v581, 1
    %v583 = vadd.f32 %v581, %v582
    %v584 = vmul.f32 %v576, 0.125
    %v585 = vmul.f32 %v583, 0.125
    %v586 = vld [vmem:[%s5] sm:$0xff]
    %v587 = vld [vmem:[%s5 + $0x8] sm:$0xff]
    %v588 = vld [vmem:[%s5 + $0x10] sm:$0xff]
    %v589 = vld [vmem:[%s5 + $0x18] sm:$0xff]
    %v590 = vld [vmem:[%s6] sm:$0x1]
    %v592 = vlaneseq
    %v593 = vshrl.u32 %v592, 7
    %v594 = vsub.s32 0, %v593
    %v595 = vrot.slane %v590, %v594
    %vm599 = vcmask 1041409
    %v600 = vsel %vm599, %v585, %v584
    %v601 = vsel %vm569, %v600, 0
    %603 = vmatprep.subr.mxu0 0.0
    %604 = vmatpush1.msra.mxu0 %v586
    %605 = vmatprep.subr.mxu0 0.0
    %606 = vmatpush1.msra.mxu0 %v587
    %607 = vmatprep.subr.mxu0 0.0
    %608 = vmatpush1.msra.mxu0 %v588
    %609 = vmatprep.subr.mxu0 0.0
    %610 = vmatpush1.msra.mxu0 %v589
    %611 = vmatprep.subr.mxu0 0.0
    %612 = vmatpush1.msra.mxu0 0.0
    %613 = vmatprep.subr.mxu0 0.0
    %614 = vmatpush1.msra.mxu0 0.0
    %615 = vmatprep.subr.mxu0 0.0
    %616 = vmatpush1.msra.mxu0 0.0
    %617 = vmatprep.subr.mxu0 0.0
    %618 = vmatpush1.msra.mxu0 0.0
    %619 = vmatprep.subr.mxu0 0.0
    %620 = vmatpush1.msra.mxu0 0.0
    %621 = vmatprep.subr.mxu0 0.0
    %622 = vmatpush1.msra.mxu0 0.0
    %623 = vmatprep.subr.mxu0 0.0
    %624 = vmatpush1.msra.mxu0 0.0
    %625 = vmatprep.subr.mxu0 0.0
    %626 = vmatpush1.msra.mxu0 0.0
    %627 = vmatprep.subr.mxu0 0.0
    %628 = vmatpush1.msra.mxu0 0.0
    %629 = vmatprep.subr.mxu0 0.0
    %630 = vmatpush1.msra.mxu0 0.0
    %631 = vmatprep.subr.mxu0 0.0
    %632 = vmatpush1.msra.mxu0 0.0
    %633 = vmatprep.subr.mxu0 0.0
    %634 = vmatpush1.msra.mxu0 0.0
    %635 = vmatprep.subr.mxu0 0.0
    %636 = vmatpush1.msra.mxu0 0.0
    %637 = vmatprep.subr.mxu0 0.0
    %638 = vmatpush1.msra.mxu0 0.0
    %639 = vmatprep.subr.mxu0 0.0
    %640 = vmatpush1.msra.mxu0 0.0
    %641 = vmatprep.subr.mxu0 0.0
    %642 = vmatpush1.msra.mxu0 0.0
    %643 = vmatprep.subr.mxu0 0.0
    %644 = vmatpush1.msra.mxu0 0.0
    %645 = vmatprep.subr.mxu0 0.0
    %646 = vmatpush1.msra.mxu0 0.0
    %647 = vmatprep.subr.mxu0 0.0
    %648 = vmatpush1.msra.mxu0 0.0
    %649 = vmatprep.subr.mxu0 0.0
    %650 = vmatpush1.msra.mxu0 0.0
    %651 = vmatprep.subr.mxu0 0.0
    %652 = vmatpush1.msra.mxu0 0.0
    %653 = vmatprep.subr.mxu0 0.0
    %654 = vmatpush1.msra.mxu0 0.0
    %655 = vmatprep.subr.mxu0 0.0
    %656 = vmatpush1.msra.mxu0 0.0
    %657 = vmatprep.subr.mxu0 0.0
    %658 = vmatpush1.msra.mxu0 0.0
    %659 = vmatprep.subr.mxu0 0.0
    %660 = vmatpush1.msra.mxu0 0.0
    %661 = vmatprep.subr.mxu0 0.0
    %662 = vmatpush1.msra.mxu0 0.0
    %663 = vmatprep.subr.mxu0 0.0
    %664 = vmatpush1.msra.mxu0 0.0
    %665 = vmatprep.subr.mxu0 0.0
    %666 = vmatpush1.msra.mxu0 0.0
    %667 = vmatprep.mubr.f32.mxu0 0.0
    %668 = vmatmul.mubr.f32.gmra.mrb[0].mxu0 %v601
    %v669 = vpop.f32.mrb[0].mxu0
    %v670 = vadd.f32 %v595, %v669
    %v671 = vpop.f32.mrb[0].mxu0
    %672 = vdwg.mxu0
    %673 = vst [vmem:[#allocation9] sm:$0x3] %v670
    %vm674 = vcmp.eq.s32.totalorder %v285, 0
    %vm675 = vcmp.eq.s32.totalorder %v285, 1
    %vm676 = vcmp.eq.s32.totalorder %v285, 2
    %v677 = vsel %vm676, 1, 0
    %vm678 = vcmp.eq.s32.totalorder %v677, 1
    %680 = vset.pattern.permute.xlu0 0
    %681 = vperm.xlu0 %680, %v150
    %v682 = vpop.permute.xlu0 %681
    %685 = vset.pattern.permute.xlu0 0
    %686 = vperm.xlu0 %685, %v151
    %v687 = vpop.permute.xlu0 %686
    %690 = vset.pattern.permute.xlu0 0
    %691 = vperm.xlu0 %690, %v152
    %v692 = vpop.permute.xlu0 %691
    %695 = vset.pattern.permute.xlu0 0
    %696 = vperm.xlu0 %695, %v153
    %v697 = vpop.permute.xlu0 %696
    %v699 = vsel %vm678, %v682, %v692
    %v700 = vsel %vm678, %v687, %v697
    %v701 = vsel %vm675, 1, 0
    %vm702 = vcmp.eq.s32.totalorder %v701, 1
    %704 = vset.pattern.permute.xlu0 0
    %705 = vperm.xlu0 %704, %v148
    %v706 = vpop.permute.xlu0 %705
    %709 = vset.pattern.permute.xlu0 0
    %710 = vperm.xlu0 %709, %v149
    %v711 = vpop.permute.xlu0 %710
    %v713 = vsel %vm702, %v706, %v699
    %v714 = vsel %vm702, %v711, %v700
    %v715 = vsel %vm674, 1, 0
    %vm716 = vcmp.eq.s32.totalorder %v715, 1
    %718 = vset.pattern.permute.xlu0 0
    %719 = vperm.xlu0 %718, %v146
    %v720 = vpop.permute.xlu0 %719
    %723 = vset.pattern.permute.xlu0 0
    %724 = vperm.xlu0 %723, %v147
    %v725 = vpop.permute.xlu0 %724
    %v727 = vsel %vm716, %v720, %v713
    %v728 = vsel %vm716, %v725, %v714
    %vm729 = vcmask 31744
    %730 = vst.msk [vmem:[%s8] sm:$0xff] %vm729, %v727
    %731 = vst.msk [vmem:[%s8 + $0x8] sm:$0xff] %vm729, %v728
    %733 = vset.pattern.permute.xlu0 0
    %734 = vperm.xlu0 %733, %v236
    %v735 = vpop.permute.xlu0 %734
    %738 = vset.pattern.permute.xlu0 0
    %739 = vperm.xlu0 %738, %v237
    %v740 = vpop.permute.xlu0 %739
    %743 = vset.pattern.permute.xlu0 0
    %744 = vperm.xlu0 %743, %v246
    %v745 = vpop.permute.xlu0 %744
    %748 = vset.pattern.permute.xlu0 0
    %749 = vperm.xlu0 %748, %v247
    %v750 = vpop.permute.xlu0 %749
    %v752 = vsel %vm678, %v735, %v745
    %v753 = vsel %vm678, %v740, %v750
    %755 = vset.pattern.permute.xlu0 0
    %756 = vperm.xlu0 %755, %v226
    %v757 = vpop.permute.xlu0 %756
    %760 = vset.pattern.permute.xlu0 0
    %761 = vperm.xlu0 %760, %v227
    %v762 = vpop.permute.xlu0 %761
    %v764 = vsel %vm702, %v757, %v752
    %v765 = vsel %vm702, %v762, %v753
    %767 = vset.pattern.permute.xlu0 0
    %768 = vperm.xlu0 %767, %v216
    %v769 = vpop.permute.xlu0 %768
    %772 = vset.pattern.permute.xlu0 0
    %773 = vperm.xlu0 %772, %v217
    %v774 = vpop.permute.xlu0 %773
    %v776 = vsel %vm716, %v769, %v764
    %v777 = vsel %vm716, %v774, %v765
    %778 = vst.msk [vmem:[%s9] sm:$0xff] %vm729, %v776
    %779 = vst.msk [vmem:[%s9 + $0x8] sm:$0xff] %vm729, %v777
    // Predicated region
    $region42: #{tpu_custom_call.1} parent=1 // pred_check
      _
    $region43: #{tpu_custom_call.1} parent=1 // pred_check_branch
      %781 = sbr.rel (0) target = $region45
    $region44: #{tpu_custom_call.1} parent=1 // pred_region
      %s783 = ssub.s32 32, 32
      %784 = vsyncadd [#allocation4], %s783
      %s786 = sshll.u32 [#allocation9], 4
      %s787 = int_to_ptr.vmem [resolvable:$true] %s786
      %789 = dma.vmem_to_hbm [thread:$0]  %s787, 32, %s7, [#allocation4]
    $region45: #{tpu_custom_call.1} parent=1 // pred_fallthru
      _
    // Predicated region
    $region46: #{tpu_custom_call.1} parent=1 // pred_check
      _
    $region47: #{tpu_custom_call.1} parent=1 // pred_check_branch
      %791 = sbr.rel (0) target = $region49
    $region48: #{tpu_custom_call.1} parent=1 // pred_region
      _
    $region49: #{tpu_custom_call.1} parent=1 // pred_fallthru
      _
    // Predicated region
    $region50: #{tpu_custom_call.1} parent=1 // pred_check
      _
    $region51: #{tpu_custom_call.1} parent=1 // pred_check_branch
      %793 = sbr.rel (0) target = $region53
    $region52: #{tpu_custom_call.1} parent=1 // pred_region
      _
    $region53: #{tpu_custom_call.1} parent=1 // pred_fallthru
      _
    // Predicated region
    $region54: #{tpu_custom_call.1} parent=1 // pred_check
      _
    $region55: #{tpu_custom_call.1} parent=1 // pred_check_branch
      %795 = sbr.rel (0) target = $region57
    $region56: #{tpu_custom_call.1} parent=1 // pred_region
      %796 = dma.done [#allocation4], 32
    $region57: #{tpu_custom_call.1} parent=1 // pred_fallthru
      _
    // Predicated region
    $region58: #{tpu_custom_call.1} parent=1 // pred_check
      _
    $region59: #{tpu_custom_call.1} parent=1 // pred_check_branch
      %798 = sbr.rel (0) target = $region61
    $region60: #{tpu_custom_call.1} parent=1 // pred_region
      _
    $region61: #{tpu_custom_call.1} parent=1 // pred_fallthru
      _
    // Predicated region
    $region62: #{tpu_custom_call.1} parent=1 // pred_check
      _
    $region63: #{tpu_custom_call.1} parent=1 // pred_check_branch
      %800 = sbr.rel (0) target = $region65
    $region64: #{tpu_custom_call.1} parent=1 // pred_region
      _
    $region65: #{tpu_custom_call.1} parent=1 // pred_fallthru
      _
    %801 = vsyncpa [#allocation3], 1
    %802 = vsyncpa [#allocation4], 1
    %803 = vsyncpa [#allocation5], 1
    %804 = vsyncpa [#allocation7], 1

</llo_original>
